<compile_context>
chip_gen: v5e
topology: v5e:2x2
jax: 0.10.0
libtpu: 0.0.40
codegen_flags: <defaults>
</compile_context>

<pallas_src>
import functools

import jax
import jax.numpy as jnp
from jax import lax
from jax.experimental import pallas as pl
from jax.experimental.pallas import tpu as pltpu


def _channel_fc_kernel(x_ref, w1_ref, b1_ref, w2_ref, b2_ref, o_ref, *,
                       bn, act_dtype, approximate):
    # x_ref : (bn, C_in, tp)   pixels on lanes
    # w1_ref: (hid, C_in)      conv-style (out, in) weight
    # b1_ref: (hid, 1)
    # w2_ref: (C_out, hid)
    # b2_ref: (C_out, 1)
    # o_ref : (bn, C_out, tp)
    w1 = w1_ref[...]
    w2 = w2_ref[...]
    b1 = b1_ref[...].astype(act_dtype)
    b2 = b2_ref[...].astype(jnp.float32)

    # Static unroll over the batch block: each image is a plain (out,in)x(in,p)
    # MXU matmul with pixels on lanes -- no transposes, no batched dot_general.
    for b in range(bn):
        x = x_ref[b]  # (C_in, tp), native dtype -> MXU at native rate

        # fc1: f32 accumulation on the MXU.
        h = jnp.dot(w1, x, preferred_element_type=jnp.float32)
        # Bias + GELU in act_dtype (f32 by default; bf16 optional on v6e/v7x).
        h = h.astype(act_dtype) + b1

        if approximate:
            # tanh-approx GELU routes through the EUP slot (otherwise idle here).
            h = jax.nn.gelu(h, approximate=True)
        else:
            # Exact GELU (PyTorch nn.GELU() default): 0.5*x*(1+erf(x/sqrt(2))).
            # Python-float constants keep h's dtype (no unintended promotion).
            h = 0.5 * h * (1.0 + lax.erf(h * 0.7071067811865476))

        # fc2: feed the MXU in the weight dtype (no-op for f32), accumulate f32.
        h = h.astype(w2.dtype)
        y = jnp.dot(w2, h, preferred_element_type=jnp.float32) + b2
        o_ref[b] = y.astype(o_ref.dtype)


def _select_tiles(N, P, C_in, hid, C_out, itemsize, tp_req, bn_req, budget):
    """Pick (bn, tp) tiles: big enough to amortize per-step overhead, small
    enough to fit a conservative cross-generation VMEM budget, and leaving the
    grid with >= 2 parallel steps when possible (v7x has 2 TensorCores)."""
    p_pad = ((P + 127) // 128) * 128
    k_max = p_pad // 128
    tp_cap_k = max(1, min(int(tp_req) // 128, k_max))
    # Multiple-of-128 divisors of the padded pixel extent, descending: the last
    # grid step along pixels is never a nearly-empty ragged block.
    tp_candidates = [128 * k for k in range(k_max, 0, -1)
                     if k_max % k == 0 and k <= tp_cap_k] or [128]

    weights_bytes = (hid * C_in + hid + C_out * hid + C_out) * itemsize  # 1-buffered

    def fits(bn_, tp_):
        io = 2 * bn_ * (C_in + C_out) * tp_ * itemsize   # double-buffered x/out tiles
        tmp = 3 * hid * tp_ * 4                          # f32 (hid, tp) intermediates
        return io + weights_bytes + tmp <= budget

    tp_eff = next((t for t in tp_candidates if fits(1, t)), tp_candidates[-1])

    bn_eff = 1
    for d in range(min(int(bn_req), N), 0, -1):
        if N % d == 0 and fits(d, tp_eff):
            bn_eff = d
            break

    def n_steps(bn_, tp_):
        return (N // bn_) * (p_pad // tp_)

    # Keep >= 2 "parallel" grid steps so both v7x TensorCores get work.
    while n_steps(bn_eff, tp_eff) < 2 and bn_eff > 1:
        bn_eff -= 1
        while N % bn_eff:
            bn_eff -= 1
    while n_steps(bn_eff, tp_eff) < 2 and tp_eff > 128:
        smaller = [t for t in tp_candidates if t < tp_eff]
        if not smaller:
            break
        tp_eff = smaller[0]

    return bn_eff, tp_eff, p_pad


@functools.partial(
    jax.jit,
    static_argnames=("tp", "bn", "approximate", "intermediate_dtype",
                     "x_buffers", "vmem_limit_bytes", "vmem_budget_bytes"))
def channel_fc(x_nchw, w1, b1, w2, b2, *, tp=2048, bn=8, approximate=False,
               intermediate_dtype=None, x_buffers=None, vmem_limit_bytes=None,
               vmem_budget_bytes=12 * 1024 * 1024):
    """ChannelFC forward: fc2(GELU(fc1(x))) with 1x1 convs.

    x_nchw: (N, C_in, H, W); w1: (hid, C_in); b1: (hid,);
    w2: (C_out, hid); b2: (C_out,).  Returns (N, C_out, H, W).

    tp / bn: requested pixel (lane) / batch tiles -- auto-shrunk to fit VMEM and
      to keep >= 2 parallel grid steps.
    approximate: use tanh GELU (EUP) instead of exact erf (numerics-changing).
    intermediate_dtype: e.g. jnp.bfloat16 on v6e/v7x to halve GELU VALU/vreg
      cost (numerics-changing); default None keeps f32 intermediates (v5e-safe).
    x_buffers: optional pipelining depth for the input tile (e.g. 3 on v7x if a
      trace shows exposed copy time).
    """
    N, C_in, H, W = x_nchw.shape
    hid = w1.shape[0]
    C_out = w2.shape[0]
    P = H * W

    # Free reshape only -- no transpose, no padding, no output slice.
    x = x_nchw.reshape(N, C_in, P)

    bn_eff, tp_eff, p_pad = _select_tiles(
        N, P, C_in, hid, C_out, jnp.dtype(x_nchw.dtype).itemsize,
        tp, bn, vmem_budget_bytes)
    grid = (N // bn_eff, p_pad // tp_eff)

    b1_2d = b1.reshape(hid, 1)
    b2_2d = b2.reshape(C_out, 1)

    act_dtype = jnp.float32 if intermediate_dtype is None else jnp.dtype(intermediate_dtype)
    kernel = functools.partial(_channel_fc_kernel, bn=bn_eff,
                               act_dtype=act_dtype, approximate=approximate)

    x_spec_kwargs = {} if x_buffers is None else {"pipeline_mode": pl.Buffered(int(x_buffers))}
    # Constant-index weight/bias blocks: single-buffered (double-buffering a
    # block whose index never changes is pure VMEM waste).
    resident = {"pipeline_mode": pl.Buffered(1)}

    out = pl.pallas_call(
        kernel,
        out_shape=jax.ShapeDtypeStruct((N, C_out, P), x_nchw.dtype),
        grid_spec=pltpu.PrefetchScalarGridSpec(
            num_scalar_prefetch=0,
            grid=grid,
            in_specs=[
                pl.BlockSpec((bn_eff, C_in, tp_eff), lambda n, p: (n, 0, p),
                             **x_spec_kwargs),
                pl.BlockSpec((hid, C_in), lambda n, p: (0, 0), **resident),
                pl.BlockSpec((hid, 1), lambda n, p: (0, 0), **resident),
                pl.BlockSpec((C_out, hid), lambda n, p: (0, 0), **resident),
                pl.BlockSpec((C_out, 1), lambda n, p: (0, 0), **resident),
            ],
            out_specs=pl.BlockSpec((bn_eff, C_out, tp_eff), lambda n, p: (n, 0, p)),
        ),
        compiler_params=pltpu.CompilerParams(
            dimension_semantics=("parallel", "parallel"),
            vmem_limit_bytes=vmem_limit_bytes,
        ),
    )(x, w1, b1_2d, w2, b2_2d)

    return out.reshape(N, C_out, H, W)


def init_params(key, in_channels, hid_channels, out_channels):
    # Mirrors ChannelFC._init_weights: trunc_normal_(std=0.02), bias = 0.
    # Weights kept in PyTorch Conv2d (out, in) layout.
    k1, k2 = jax.random.split(key)
    w1 = 0.02 * jax.random.truncated_normal(
        k1, -100.0, 100.0, (hid_channels, in_channels), jnp.float32)
    b1 = jnp.zeros((hid_channels,), jnp.float32)
    w2 = 0.02 * jax.random.truncated_normal(
        k2, -100.0, 100.0, (out_channels, hid_channels), jnp.float32)
    b2 = jnp.zeros((out_channels,), jnp.float32)
    return w1, b1, w2, b2


def _reference(x_nchw, w1, b1, w2, b2):
    N, C_in, H, W = x_nchw.shape
    C_out = w2.shape[0]
    xf = x_nchw.reshape(N, C_in, H * W)
    h = jnp.einsum("oi,nip->nop", w1, xf) + b1[:, None]
    h = jax.nn.gelu(h, approximate=False)
    y = jnp.einsum("oh,nhp->nop", w2, h) + b2[:, None]
    return y.reshape(N, C_out, H, W)


if __name__ == "__main__":
    key = jax.random.PRNGKey(0)
    k_x, k_p, k_b1, k_b2, k_x2 = jax.random.split(key, 5)

    N, C_in, H, W = 2, 4, 16, 16
    hid, C_out = 32, 4

    x = jax.random.normal(k_x, (N, C_in, H, W), jnp.float32)
    w1, b1, w2, b2 = init_params(k_p, C_in, hid, C_out)

    # Check 1: module-faithful init (zero bias), default exact-erf GELU.
    y = channel_fc(x, w1, b1, w2, b2)
    jax.block_until_ready(y)
    y_ref = _reference(x, w1, b1, w2, b2)
    assert y.shape == (N, C_out, H, W)
    assert jnp.allclose(y, y_ref, atol=1e-5, rtol=1e-5), "mismatch vs reference"

    # Check 2: nonzero biases + larger batch so the batch-blocked (bn > 1)
    # path and the bias path are both exercised.
    N2 = 4
    x2 = jax.random.normal(k_x2, (N2, C_in, H, W), jnp.float32)
    b1_r = 0.1 * jax.random.normal(k_b1, (hid,), jnp.float32)
    b2_r = 0.1 * jax.random.normal(k_b2, (C_out,), jnp.float32)
    y2 = channel_fc(x2, w1, b1_r, w2, b2_r)
    jax.block_until_ready(y2)
    y2_ref = _reference(x2, w1, b1_r, w2, b2_r)
    assert jnp.allclose(y2, y2_ref, atol=1e-5, rtol=1e-5), "mismatch vs reference (bias)"

    print("KERNEL_OK")
</pallas_src>

<mosaic_0001>
module attributes {stable_mosaic.version = 11 : i64} {
  func.func @_channel_fc_kernel(%arg0: i32, %arg1: i32, %arg2: memref<1x4x256xf32, #tpu.memory_space<vmem>>, %arg3: memref<32x4xf32, #tpu.memory_space<vmem>>, %arg4: memref<32x1xf32, #tpu.memory_space<vmem>>, %arg5: memref<4x32xf32, #tpu.memory_space<vmem>>, %arg6: memref<4x1xf32, #tpu.memory_space<vmem>>, %arg7: memref<1x4x256xf32, #tpu.memory_space<vmem>>) attributes {dimension_semantics = [#tpu.dimension_semantics<parallel>, #tpu.dimension_semantics<parallel>], iteration_bounds = array<i64: 2, 1>, scalar_prefetch = 0 : i64, scratch_operands = 0 : i64, tpu.core_type = #tpu.core_type<tc>, window_params = [{transform_indices = @transform_0, window_bounds = array<i64: 1, 4, 256>}, {pipeline_mode = #tpu.pipeline_mode<synchronous>, transform_indices = @transform_1, window_bounds = array<i64: 32, 4>}, {pipeline_mode = #tpu.pipeline_mode<synchronous>, transform_indices = @transform_2, window_bounds = array<i64: 32, 1>}, {pipeline_mode = #tpu.pipeline_mode<synchronous>, transform_indices = @transform_3, window_bounds = array<i64: 4, 32>}, {pipeline_mode = #tpu.pipeline_mode<synchronous>, transform_indices = @transform_4, window_bounds = array<i64: 4, 1>}, {transform_indices = @transform_5, window_bounds = array<i64: 1, 4, 256>}]} {
    %c0 = arith.constant 0 : index
    %c0_0 = arith.constant 0 : index
    %0 = vector.load %arg3[%c0, %c0_0] : memref<32x4xf32, #tpu.memory_space<vmem>>, vector<32x4xf32>
    %c0_1 = arith.constant 0 : index
    %c0_2 = arith.constant 0 : index
    %1 = vector.load %arg5[%c0_1, %c0_2] : memref<4x32xf32, #tpu.memory_space<vmem>>, vector<4x32xf32>
    %c0_3 = arith.constant 0 : index
    %c0_4 = arith.constant 0 : index
    %2 = vector.load %arg4[%c0_3, %c0_4] : memref<32x1xf32, #tpu.memory_space<vmem>>, vector<32x1xf32>
    %c0_5 = arith.constant 0 : index
    %c0_6 = arith.constant 0 : index
    %3 = vector.load %arg6[%c0_5, %c0_6] : memref<4x1xf32, #tpu.memory_space<vmem>>, vector<4x1xf32>
    %c0_7 = arith.constant 0 : index
    %c0_8 = arith.constant 0 : index
    %c0_9 = arith.constant 0 : index
    %4 = vector.load %arg2[%c0_7, %c0_8, %c0_9] : memref<1x4x256xf32, #tpu.memory_space<vmem>>, vector<1x4x256xf32>
    %5 = vector.shape_cast %4 : vector<1x4x256xf32> to vector<4x256xf32>
    %cst = arith.constant dense<0.000000e+00> : vector<32x256xf32>
    %6 = tpu.matmul %0, %5, %cst {dimension_numbers = #tpu.dot_dimension_numbers<[1], [0], [0], [1], [0, 0, 1, 1], [], []>} : vector<32x4xf32>, vector<4x256xf32>, vector<32x256xf32> -> vector<32x256xf32>
    %7 = vector.broadcast %2 : vector<32x1xf32> to vector<32x256xf32>
    %8 = arith.addf %6, %7 : vector<32x256xf32>
    %cst_10 = arith.constant 5.000000e-01 : f32
    %9 = vector.broadcast %cst_10 : f32 to vector<32x256xf32>
    %10 = arith.mulf %9, %8 : vector<32x256xf32>
    %cst_11 = arith.constant 0.707106769 : f32
    %11 = vector.broadcast %cst_11 : f32 to vector<32x256xf32>
    %12 = arith.mulf %8, %11 : vector<32x256xf32>
    %13 = math.erf %12 : vector<32x256xf32>
    %cst_12 = arith.constant 1.000000e+00 : f32
    %14 = vector.broadcast %cst_12 : f32 to vector<32x256xf32>
    %15 = arith.addf %14, %13 : vector<32x256xf32>
    %16 = arith.mulf %10, %15 : vector<32x256xf32>
    %cst_13 = arith.constant dense<0.000000e+00> : vector<4x256xf32>
    %17 = tpu.matmul %1, %16, %cst_13 {dimension_numbers = #tpu.dot_dimension_numbers<[1], [0], [0], [1], [0, 0, 1, 1], [], []>} : vector<4x32xf32>, vector<32x256xf32>, vector<4x256xf32> -> vector<4x256xf32>
    %18 = vector.broadcast %3 : vector<4x1xf32> to vector<4x256xf32>
    %19 = arith.addf %17, %18 : vector<4x256xf32>
    %c0_14 = arith.constant 0 : index
    %c0_15 = arith.constant 0 : index
    %c0_16 = arith.constant 0 : index
    %20 = vector.load %arg7[%c0_14, %c0_15, %c0_16] : memref<1x4x256xf32, #tpu.memory_space<vmem>>, vector<1x4x256xf32>
    %21 = vector.shape_cast %20 : vector<1x4x256xf32> to vector<4x256xf32>
    %22 = vector.shape_cast %19 : vector<4x256xf32> to vector<1x4x256xf32>
    tpu.vector_store %arg7[%c0_14, %c0_15, %c0_16], %22 {strides = array<i32>} : memref<1x4x256xf32, #tpu.memory_space<vmem>>, vector<1x4x256xf32>,
    return
  }
  func.func @transform_0(%arg0: i32, %arg1: i32) -> (i32, i32, i32) {
    %c0_i32 = arith.constant 0 : i32
    %c0_i32_0 = arith.constant 0 : i32
    return %arg0, %c0_i32, %arg1 : i32, i32, i32
  }
  func.func @transform_1(%arg0: i32, %arg1: i32) -> (i32, i32) {
    %c0_i32 = arith.constant 0 : i32
    %c0_i32_0 = arith.constant 0 : i32
    %c0_i32_1 = arith.constant 0 : i32
    return %c0_i32, %c0_i32_0 : i32, i32
  }
  func.func @transform_2(%arg0: i32, %arg1: i32) -> (i32, i32) {
    %c0_i32 = arith.constant 0 : i32
    %c0_i32_0 = arith.constant 0 : i32
    %c0_i32_1 = arith.constant 0 : i32
    return %c0_i32, %c0_i32_0 : i32, i32
  }
  func.func @transform_3(%arg0: i32, %arg1: i32) -> (i32, i32) {
    %c0_i32 = arith.constant 0 : i32
    %c0_i32_0 = arith.constant 0 : i32
    %c0_i32_1 = arith.constant 0 : i32
    return %c0_i32, %c0_i32_0 : i32, i32
  }
  func.func @transform_4(%arg0: i32, %arg1: i32) -> (i32, i32) {
    %c0_i32 = arith.constant 0 : i32
    %c0_i32_0 = arith.constant 0 : i32
    %c0_i32_1 = arith.constant 0 : i32
    return %c0_i32, %c0_i32_0 : i32, i32
  }
  func.func @transform_5(%arg0: i32, %arg1: i32) -> (i32, i32, i32) {
    %c0_i32 = arith.constant 0 : i32
    %c0_i32_0 = arith.constant 0 : i32
    return %arg0, %c0_i32, %arg1 : i32, i32, i32
  }
}

</mosaic_0001>

<llo_original>
// kernel: channel_fc.1
$region0: #{channel_fc.1}
  #allocation0 [shape = 'u32[]', space=smem, size = 0x4, offset = 0x4, fixed_abs, tag = 'smem constant byte address 0x4 - core index']
  #allocation1 [shape = 'u32[72,128]{1,0:T(1,128)}', space=vmem, size = 0x9000, scoped, tag = 'internal scratch']
  %s0 = inlined_call_operand.vmem [shape: f32[2,4,256], index: 0, kind: input, shape index: {}]
  %s1 = inlined_call_operand.vmem [shape: f32[32,4], index: 1, kind: input, shape index: {}]
  %s2 = inlined_call_operand.vmem [shape: f32[32,1], index: 2, kind: input, shape index: {}]
  %s3 = inlined_call_operand.vmem [shape: f32[4,32], index: 3, kind: input, shape index: {}]
  %s4 = inlined_call_operand.vmem [shape: f32[4,1], index: 4, kind: input, shape index: {}]
  %s5 = inlined_call_operand.vmem [shape: f32[2,4,256], index: 5, kind: output, shape index: {}]
  %s6 = sld [smem:[#allocation0]]
  $region53: #{channel_fc.1} parent=0
    _
  %s8 = ssub.s32 1, %s6
  %s9 = scalar_select 0, %s8, %s6
  loop: start=0, step=1, limit=4
  $region2: #{channel_fc.1} parent=0 // loop_pre_header
    _
  $region3: #{channel_fc.1} parent=0 // loop_header
    %s11 = sphi 0, %s15
    %p12 = scmp.ge.s32.totalorder %s11, 4
    %s18 = sphi 0, %s30
    %s19 = sphi 0, %s26
    %s20 = sphi 0, %s18
    %s21 = sphi 0, %s19
    %s22 = sphi 0, %s20
    %s23 = sphi 0, %s21
    %s35 = sphi 0, %s37
    %s38 = sphi 0, %s35
    %s39 = sphi 0, %s38
    %s55 = sphi 0, %s39
    %s59 = sphi 0, %s59
    %s61 = sphi 0, %s59
    %s62 = sphi 0, %s61
    %s76 = sphi 0, %s62
    %s80 = sphi 0, %s80
    %s82 = sphi 0, %s80
    %s83 = sphi 0, %s82
    %s97 = sphi 0, %s83
    %s101 = sphi 0, %s101
    %s103 = sphi 0, %s101
    %s104 = sphi 0, %s103
    %s118 = sphi 0, %s104
    %s122 = sphi 0, %s122
    %s124 = sphi 0, %s122
    %s125 = sphi 0, %s124
    %s139 = sphi 0, %s125
    %s147 = sphi 0, %s149
    %s150 = sphi 0, %s147
    %s151 = sphi 0, %s150
    %s167 = sphi 0, %s151
  $region4: #{channel_fc.1} parent=0 // loop_header_branch
    %14 = sbr.rel (%p12) target = $region8
  $region5: #{channel_fc.1} parent=0 // loop_body
    %s16 = ssub.s32 %s11, 1
    %s17 = ssub.s32 %s11, 2
    %s24 = sadd.s32 1, %s19
    %p25 = scmp.ge.s32.totalorder %s24, 1
    %s26 = scalar_select %p25, 0, %s24
    %s27 = sadd.s32 1, %s18
    %s28 = scalar_select %p25, %s27, %s18
    %p29 = scmp.ge.s32.totalorder %s28, 2
    %s30 = scalar_select %p29, 0, %s28
    %s31 = ssub.s32 %s18, %s30
    %s32 = ssub.s32 %s19, %s26
    %s33 = sor.u32 %s31, %s32
    %p34 = scmp.eq.s32.totalorder %s33, 0
    %s36 = sadd.s32 %s35, 1
    %s37 = scalar_select %p34, %s35, %s36
    %p40 = pneg %p34
    %p41 = scmp.eq.s32.totalorder %s11, 1
    %p42 = por %p40, %p41
    %p43 = scmp.ne.s32.totalorder %s35, %s38
    %p44 = scmp.eq.s32.totalorder %s11, 0
    %p45 = por %p43, %p44
    %p46 = scmp.ne.s32.totalorder %s35, %s38
    %p47 = scmp.eq.s32.totalorder %s16, 1
    %p48 = por %p46, %p47
    %p49 = scmp.ne.s32.totalorder %s38, %s39
    %p50 = scmp.eq.s32.totalorder %s16, 0
    %p51 = por %p49, %p50
    %p52 = scmp.ne.s32.totalorder %s38, %s39
    %p53 = scmp.eq.s32.totalorder %s17, 1
    %p54 = por %p52, %p53
    %p56 = scmp.ne.s32.totalorder %s39, %s55
    %p57 = scmp.eq.s32.totalorder %s17, 0
    %p58 = por %p56, %p57
    %s60 = sadd.s32 %s59, 1
    %p63 = scmp.eq.s32.totalorder %s11, 1
    %p64 = scmp.ne.s32.totalorder %s59, %s61
    %p65 = scmp.eq.s32.totalorder %s11, 0
    %p66 = por %p64, %p65
    %p67 = scmp.ne.s32.totalorder %s59, %s61
    %p68 = scmp.eq.s32.totalorder %s16, 1
    %p69 = por %p67, %p68
    %p70 = scmp.ne.s32.totalorder %s61, %s62
    %p71 = scmp.eq.s32.totalorder %s16, 0
    %p72 = por %p70, %p71
    %p73 = scmp.ne.s32.totalorder %s61, %s62
    %p74 = scmp.eq.s32.totalorder %s17, 1
    %p75 = por %p73, %p74
    %p77 = scmp.ne.s32.totalorder %s62, %s76
    %p78 = scmp.eq.s32.totalorder %s17, 0
    %p79 = por %p77, %p78
    %s81 = sadd.s32 %s80, 1
    %p84 = scmp.eq.s32.totalorder %s11, 1
    %p85 = scmp.ne.s32.totalorder %s80, %s82
    %p86 = scmp.eq.s32.totalorder %s11, 0
    %p87 = por %p85, %p86
    %p88 = scmp.ne.s32.totalorder %s80, %s82
    %p89 = scmp.eq.s32.totalorder %s16, 1
    %p90 = por %p88, %p89
    %p91 = scmp.ne.s32.totalorder %s82, %s83
    %p92 = scmp.eq.s32.totalorder %s16, 0
    %p93 = por %p91, %p92
    %p94 = scmp.ne.s32.totalorder %s82, %s83
    %p95 = scmp.eq.s32.totalorder %s17, 1
    %p96 = por %p94, %p95
    %p98 = scmp.ne.s32.totalorder %s83, %s97
    %p99 = scmp.eq.s32.totalorder %s17, 0
    %p100 = por %p98, %p99
    %s102 = sadd.s32 %s101, 1
    %p105 = scmp.eq.s32.totalorder %s11, 1
    %p106 = scmp.ne.s32.totalorder %s101, %s103
    %p107 = scmp.eq.s32.totalorder %s11, 0
    %p108 = por %p106, %p107
    %p109 = scmp.ne.s32.totalorder %s101, %s103
    %p110 = scmp.eq.s32.totalorder %s16, 1
    %p111 = por %p109, %p110
    %p112 = scmp.ne.s32.totalorder %s103, %s104
    %p113 = scmp.eq.s32.totalorder %s16, 0
    %p114 = por %p112, %p113
    %p115 = scmp.ne.s32.totalorder %s103, %s104
    %p116 = scmp.eq.s32.totalorder %s17, 1
    %p117 = por %p115, %p116
    %p119 = scmp.ne.s32.totalorder %s104, %s118
    %p120 = scmp.eq.s32.totalorder %s17, 0
    %p121 = por %p119, %p120
    %s123 = sadd.s32 %s122, 1
    %p126 = scmp.eq.s32.totalorder %s11, 1
    %p127 = scmp.ne.s32.totalorder %s122, %s124
    %p128 = scmp.eq.s32.totalorder %s11, 0
    %p129 = por %p127, %p128
    %p130 = scmp.ne.s32.totalorder %s122, %s124
    %p131 = scmp.eq.s32.totalorder %s16, 1
    %p132 = por %p130, %p131
    %p133 = scmp.ne.s32.totalorder %s124, %s125
    %p134 = scmp.eq.s32.totalorder %s16, 0
    %p135 = por %p133, %p134
    %p136 = scmp.ne.s32.totalorder %s124, %s125
    %p137 = scmp.eq.s32.totalorder %s17, 1
    %p138 = por %p136, %p137
    %p140 = scmp.ne.s32.totalorder %s125, %s139
    %p141 = scmp.eq.s32.totalorder %s17, 0
    %p142 = por %p140, %p141
    %s143 = ssub.s32 %s18, %s30
    %s144 = ssub.s32 %s19, %s26
    %s145 = sor.u32 %s143, %s144
    %p146 = scmp.eq.s32.totalorder %s145, 0
    %s148 = sadd.s32 %s147, 1
    %s149 = scalar_select %p146, %s147, %s148
    %p152 = pneg %p146
    %p153 = scmp.eq.s32.totalorder %s11, 1
    %p154 = por %p152, %p153
    %p155 = scmp.ne.s32.totalorder %s147, %s150
    %p156 = scmp.eq.s32.totalorder %s11, 0
    %p157 = por %p155, %p156
    %p158 = scmp.ne.s32.totalorder %s147, %s150
    %p159 = scmp.eq.s32.totalorder %s16, 1
    %p160 = por %p158, %p159
    %p161 = scmp.ne.s32.totalorder %s150, %s151
    %p162 = scmp.eq.s32.totalorder %s16, 0
    %p163 = por %p161, %p162
    %p164 = scmp.ne.s32.totalorder %s150, %s151
    %p165 = scmp.eq.s32.totalorder %s17, 1
    %p166 = por %p164, %p165
    %p168 = scmp.ne.s32.totalorder %s151, %s167
    %p169 = scmp.eq.s32.totalorder %s17, 0
    %p170 = por %p168, %p169
    %p171 = scmp.le.s32.totalorder 1, %s11
    %p172 = scmp.lt.s32.totalorder %s11, 3
    %p173 = pnand %p171, %p172
    %p174 = pneg %p173
    // Predicated region
    $region9: #{channel_fc.1} parent=5 // pred_check
      _
    $region10: #{channel_fc.1} parent=5 // pred_check_branch
      %176 = sbr.rel (%p173) target = $region12
    $region11: #{channel_fc.1} parent=5 // pred_region
      %s177 = ssub.s32 %s11, 1
      // Predicated region
      $region13: #{channel_fc.1} parent=11 // pred_check
        %p178 = pneg %p72
      $region14: #{channel_fc.1} parent=11 // pred_check_branch
        %180 = sbr.rel (%p178) target = $region16
      $region15: #{channel_fc.1} parent=11 // pred_region
        _
      $region16: #{channel_fc.1} parent=11 // pred_fallthru
        _
      // Predicated region
      $region17: #{channel_fc.1} parent=11 // pred_check
        %p181 = pneg %p93
      $region18: #{channel_fc.1} parent=11 // pred_check_branch
        %183 = sbr.rel (%p181) target = $region20
      $region19: #{channel_fc.1} parent=11 // pred_region
        _
      $region20: #{channel_fc.1} parent=11 // pred_fallthru
        _
      // Predicated region
      $region21: #{channel_fc.1} parent=11 // pred_check
        %p184 = pneg %p114
      $region22: #{channel_fc.1} parent=11 // pred_check_branch
        %186 = sbr.rel (%p184) target = $region24
      $region23: #{channel_fc.1} parent=11 // pred_region
        _
      $region24: #{channel_fc.1} parent=11 // pred_fallthru
        _
      // Predicated region
      $region25: #{channel_fc.1} parent=11 // pred_check
        %p187 = pneg %p135
      $region26: #{channel_fc.1} parent=11 // pred_check_branch
        %189 = sbr.rel (%p187) target = $region28
      $region27: #{channel_fc.1} parent=11 // pred_region
        _
      $region28: #{channel_fc.1} parent=11 // pred_fallthru
        _
    $region12: #{channel_fc.1} parent=5 // pred_fallthru
      _
    %p190 = scmp.lt.s32.totalorder %s11, 2
    // Predicated region
    $region29: #{channel_fc.1} parent=5 // pred_check
      %p191 = pneg %p190
    $region30: #{channel_fc.1} parent=5 // pred_check_branch
      %193 = sbr.rel (%p191) target = $region32
    $region31: #{channel_fc.1} parent=5 // pred_region
      // Predicated region
      $region33: #{channel_fc.1} parent=31 // pred_check
        %p194 = pneg %p45
      $region34: #{channel_fc.1} parent=31 // pred_check_branch
        %196 = sbr.rel (%p194) target = $region36
      $region35: #{channel_fc.1} parent=31 // pred_region
        %s197 = smul.u32 2, %s19
        %p198 = scmp.lt.s32.totalorder %s18, 1
        %s199 = scalar_select %p198, %s18, 1
        %p200 = scmp.lt.s32.totalorder %s197, 1
        %s201 = scalar_select %p200, %s197, 1
        %s202 = smul.addr %s199, 2
        %s203 = sadd.s32 %s201, %s202
        %s204 = smul.addr %s203, 4
        %s205 = scalar_lea.vmem %s0, %s204
        %s206 = smul.u32 2, %s19
      $region36: #{channel_fc.1} parent=31 // pred_fallthru
        _
    $region32: #{channel_fc.1} parent=5 // pred_fallthru
      _
    %p207 = scmp.le.s32.totalorder 1, %s11
    %p208 = scmp.lt.s32.totalorder %s11, 3
    %p209 = pnand %p207, %p208
    %p210 = pneg %p209
    // Predicated region
    $region37: #{channel_fc.1} parent=5 // pred_check
      _
    $region38: #{channel_fc.1} parent=5 // pred_check_branch
      %212 = sbr.rel (%p209) target = $region40
    $region39: #{channel_fc.1} parent=5 // pred_region
      %s213 = ssub.s32 %s11, 1
      %s214 = smul.u32 2, %s21
      %p215 = scmp.lt.s32.totalorder %s20, 1
      %s216 = scalar_select %p215, %s20, 1
      %p217 = scmp.lt.s32.totalorder %s214, 1
      %s218 = scalar_select %p217, %s214, 1
      %s219 = smul.addr %s216, 2
      %s220 = sadd.s32 %s218, %s219
      %s221 = smul.addr %s220, 4
      %s222 = scalar_lea.vmem %s0, %s221
      %p223 = pneg %p51
      %p224 = pneg %p48
      %p225 = pneg %p72
      %p226 = pneg %p69
      %p227 = pneg %p93
      %p228 = pneg %p90
      %p229 = pneg %p114
      %p230 = pneg %p111
      %p231 = pneg %p135
      %p232 = pneg %p132
      %p233 = pneg %p163
      %p234 = pneg %p160
      %s235 = smul.u32 2, %s21
      %p236 = scmp.lt.s32.totalorder %s20, 1
      %s237 = scalar_select %p236, %s20, 1
      %p238 = scmp.lt.s32.totalorder %s235, 1
      %s239 = scalar_select %p238, %s235, 1
      %s240 = smul.addr %s237, 2
      %s241 = sadd.s32 %s239, %s240
      %s242 = smul.addr %s241, 4
      %s243 = scalar_lea.vmem %s5, %s242
      %s244 = smul.u32 2, %s21
      %p245 = scmp.lt.s32.totalorder %s20, 1
      %s246 = scalar_select %p245, %s20, 1
      %p247 = scmp.lt.s32.totalorder %s244, 1
      %s248 = scalar_select %p247, %s244, 1
      %s249 = smul.addr %s246, 2
      %s250 = sadd.s32 %s248, %s249
      %s251 = smul.addr %s250, 4
      %s252 = scalar_lea.vmem %s0, %s251
      %s253 = smul.u32 2, %s21
      %s254 = smul.u32 2, %s21
      %p255 = scmp.lt.s32.totalorder %s20, 1
      %s256 = scalar_select %p255, %s20, 1
      %p257 = scmp.lt.s32.totalorder %s254, 1
      %s258 = scalar_select %p257, %s254, 1
      %s259 = smul.addr %s256, 2
      %s260 = sadd.s32 %s258, %s259
      %s261 = smul.addr %s260, 4
      %s262 = scalar_lea.vmem %s5, %s261
      %s263 = smul.u32 2, %s21
      %v264 = vld [vmem:[%s1] sm:$0xff]
      %v265 = vld [vmem:[%s1 + $0x8] sm:$0xff]
      %v266 = vld [vmem:[%s1 + $0x10] sm:$0xff]
      %v267 = vld [vmem:[%s1 + $0x18] sm:$0xff]
      %v268 = vld [vmem:[%s3] sm:$0xf]
      %v269 = vld [vmem:[%s2] sm:$0xff]
      %v270 = vld [vmem:[%s2 + $0x8] sm:$0xff]
      %v271 = vld [vmem:[%s2 + $0x10] sm:$0xff]
      %v272 = vld [vmem:[%s2 + $0x18] sm:$0xff]
      %v273 = vld [vmem:[%s4] sm:$0xf]
      %v274 = vld [vmem:[%s252] sm:$0xff]
      %276 = vset.pattern.permute.xlu0 0
      %277 = vperm.xlu0 %276, %v269
      %v278 = vpop.permute.xlu0 %277
      %281 = vset.pattern.permute.xlu0 0
      %282 = vperm.xlu0 %281, %v270
      %v283 = vpop.permute.xlu0 %282
      %286 = vset.pattern.permute.xlu0 0
      %287 = vperm.xlu0 %286, %v271
      %v288 = vpop.permute.xlu0 %287
      %291 = vset.pattern.permute.xlu0 0
      %292 = vperm.xlu0 %291, %v272
      %v293 = vpop.permute.xlu0 %292
      %296 = vst [vmem:[#allocation1] ss:$2 sm:$0xff] %v274
      %v297 = vld.sshfl [vmem:[#allocation1] sm:$0xff pattern:$0x75316420]
      %v298 = vld.sshfl [vmem:[#allocation1 + $0x8] sm:$0xff pattern:$0x75316420]
      %vm299 = vcmask 31744
      %v301 = vsel %vm299, %v264, 0
      %v304 = vsel %vm299, %v265, 0
      %v307 = vsel %vm299, %v266, 0
      %v310 = vsel %vm299, %v267, 0
      %vm312 = vcmask 1043456
      %v313 = vsel %vm312, %v297, 0
      %v315 = vsel %vm312, %v298, 0
      %317 = vmatpush.msra.mxu0 0.0
      %318 = vmatpush.msra.mxu0 0.0
      %319 = vmatpush.msra.mxu0 0.0
      %320 = vmatpush.msra.mxu0 0.0
      %321 = vmatpush.msra.mxu0 0.0
      %322 = vmatpush.msra.mxu0 0.0
      %323 = vmatpush.msra.mxu0 0.0
      %324 = vmatpush.msra.mxu0 0.0
      %325 = vmatpush.msra.mxu0 0.0
      %326 = vmatpush.msra.mxu0 0.0
      %327 = vmatpush.msra.mxu0 0.0
      %328 = vmatpush.msra.mxu0 0.0
      %329 = vmatpush.msra.mxu0 0.0
      %330 = vmatpush.msra.mxu0 0.0
      %331 = vmatpush.msra.mxu0 0.0
      %332 = vmatpush.msra.mxu0 %v313
      %333 = vmatmul.f32.gmra.mxu0 %v301
      %v334 = vpop.f32.mrf.mxu0
      %v335 = vadd.f32 %v278, %v334
      %336 = vmatmul.f32.gmra.mxu0 %v304
      %v337 = vpop.f32.mrf.mxu0
      %v338 = vadd.f32 %v283, %v337
      %339 = vmatmul.f32.gmra.mxu0 %v307
      %v340 = vpop.f32.mrf.mxu0
      %v341 = vadd.f32 %v288, %v340
      %342 = vmatmul.f32.gmra.mxu0 %v310
      %v343 = vpop.f32.mrf.mxu0
      %v344 = vadd.f32 %v293, %v343
      %345 = vdwg.mxu0
      %346 = vmatpush.msra.mxu0 0.0
      %347 = vmatpush.msra.mxu0 0.0
      %348 = vmatpush.msra.mxu0 0.0
      %349 = vmatpush.msra.mxu0 0.0
      %350 = vmatpush.msra.mxu0 0.0
      %351 = vmatpush.msra.mxu0 0.0
      %352 = vmatpush.msra.mxu0 0.0
      %353 = vmatpush.msra.mxu0 0.0
      %354 = vmatpush.msra.mxu0 0.0
      %355 = vmatpush.msra.mxu0 0.0
      %356 = vmatpush.msra.mxu0 0.0
      %357 = vmatpush.msra.mxu0 0.0
      %358 = vmatpush.msra.mxu0 0.0
      %359 = vmatpush.msra.mxu0 0.0
      %360 = vmatpush.msra.mxu0 0.0
      %361 = vmatpush.msra.mxu0 %v315
      %362 = vmatmul.f32.gmra.mxu0 %v301
      %v363 = vpop.f32.mrf.mxu0
      %v364 = vadd.f32 %v278, %v363
      %365 = vmatmul.f32.gmra.mxu0 %v304
      %v366 = vpop.f32.mrf.mxu0
      %v367 = vadd.f32 %v283, %v366
      %368 = vmatmul.f32.gmra.mxu0 %v307
      %v369 = vpop.f32.mrf.mxu0
      %v370 = vadd.f32 %v288, %v369
      %371 = vmatmul.f32.gmra.mxu0 %v310
      %v372 = vpop.f32.mrf.mxu0
      %v373 = vadd.f32 %v293, %v372
      %374 = vdwg.mxu0
      %v375 = vmul.f32 %v335, 0.5
      %v376 = vmul.f32 %v364, 0.5
      %v377 = vmul.f32 %v338, 0.5
      %v378 = vmul.f32 %v367, 0.5
      %v379 = vmul.f32 %v341, 0.5
      %v380 = vmul.f32 %v370, 0.5
      %v381 = vmul.f32 %v344, 0.5
      %v382 = vmul.f32 %v373, 0.5
      %v383 = vmul.f32 %v335, 0.70710677
      %v384 = vmul.f32 %v364, 0.70710677
      %v385 = vmul.f32 %v338, 0.70710677
      %v386 = vmul.f32 %v367, 0.70710677
      %v387 = vmul.f32 %v341, 0.70710677
      %v388 = vmul.f32 %v370, 0.70710677
      %v389 = vmul.f32 %v344, 0.70710677
      %v390 = vmul.f32 %v373, 0.70710677
      %v391 = vmul.f32 %v383, %v383
      %v392 = vmin.f32 16.0, %v391
      %v393 = vmul.f32 %v392, 2.1237322e-06
      %v394 = vadd.f32 %v393, 0.00028619796
      %v395 = vmul.f32 %v392, %v394
      %v396 = vadd.f32 %v395, 0.0036580483
      %v397 = vmul.f32 %v392, %v396
      %v398 = vadd.f32 %v397, 0.05243302
      %v399 = vmul.f32 %v392, %v398
      %v400 = vadd.f32 %v399, 0.18741608
      %v401 = vmul.f32 %v392, %v400
      %v402 = vadd.f32 %v401, 1.1283791
      %v403 = vmul.f32 %v383, %v402
      %v404 = vmul.f32 %v392, 3.8918573e-05
      %v405 = vadd.f32 %v404, 0.001143296
      %v406 = vmul.f32 %v392, %v405
      %v407 = vadd.f32 %v406, 0.014752088
      %v408 = vmul.f32 %v392, %v407
      %v409 = vadd.f32 %v408, 0.112945676
      %v410 = vmul.f32 %v392, %v409
      %v411 = vadd.f32 %v410, 0.4994258
      %v412 = vmul.f32 %v392, %v411
      %v413 = vadd.f32 %v412, 1.0
      %v414 = vrcp.pop %v413
      %v415 = vmul.f32 %v413, %v414
      %v416 = vsub.f32 1.0, %v415
      %v417 = vmul.f32 %v414, %v416
      %v418 = vadd.f32 %v414, %v417
      %vm419 = vweird.f32 %v413
      %vm420 = vweird.f32 %v414
      %vm421 = vmor %vm419, %vm420
      %v422 = vsel %vm421, %v414, %v418
      %v423 = vand.u32 2147483647, %v413
      %vm424 = vcmp.eq.f32.partialorder %v423, 8.507059e+37
      %v425 = vand.u32 %v413, 2147483648
      %v426 = vor.u32 1.1754944e-38, %v425
      %v427 = vsel %vm424, %v426, %v422
      %v428 = vmul.f32 %v403, %v427
      %v429 = vmin.f32 %v428, 1.0
      %v430 = vmax.f32 %v429, -1.0
      %v431 = vmul.f32 %v384, %v384
      %v432 = vmin.f32 16.0, %v431
      %v433 = vmul.f32 %v432, 2.1237322e-06
      %v434 = vadd.f32 %v433, 0.00028619796
      %v435 = vmul.f32 %v432, %v434
      %v436 = vadd.f32 %v435, 0.0036580483
      %v437 = vmul.f32 %v432, %v436
      %v438 = vadd.f32 %v437, 0.05243302
      %v439 = vmul.f32 %v432, %v438
      %v440 = vadd.f32 %v439, 0.18741608
      %v441 = vmul.f32 %v432, %v440
      %v442 = vadd.f32 %v441, 1.1283791
      %v443 = vmul.f32 %v384, %v442
      %v444 = vmul.f32 %v432, 3.8918573e-05
      %v445 = vadd.f32 %v444, 0.001143296
      %v446 = vmul.f32 %v432, %v445
      %v447 = vadd.f32 %v446, 0.014752088
      %v448 = vmul.f32 %v432, %v447
      %v449 = vadd.f32 %v448, 0.112945676
      %v450 = vmul.f32 %v432, %v449
      %v451 = vadd.f32 %v450, 0.4994258
      %v452 = vmul.f32 %v432, %v451
      %v453 = vadd.f32 %v452, 1.0
      %v454 = vrcp.pop %v453
      %v455 = vmul.f32 %v453, %v454
      %v456 = vsub.f32 1.0, %v455
      %v457 = vmul.f32 %v454, %v456
      %v458 = vadd.f32 %v454, %v457
      %vm459 = vweird.f32 %v453
      %vm460 = vweird.f32 %v454
      %vm461 = vmor %vm459, %vm460
      %v462 = vsel %vm461, %v454, %v458
      %v463 = vand.u32 2147483647, %v453
      %vm464 = vcmp.eq.f32.partialorder %v463, 8.507059e+37
      %v465 = vand.u32 %v453, 2147483648
      %v466 = vor.u32 1.1754944e-38, %v465
      %v467 = vsel %vm464, %v466, %v462
      %v468 = vmul.f32 %v443, %v467
      %v469 = vmin.f32 %v468, 1.0
      %v470 = vmax.f32 %v469, -1.0
      %v471 = vmul.f32 %v385, %v385
      %v472 = vmin.f32 16.0, %v471
      %v473 = vmul.f32 %v472, 2.1237322e-06
      %v474 = vadd.f32 %v473, 0.00028619796
      %v475 = vmul.f32 %v472, %v474
      %v476 = vadd.f32 %v475, 0.0036580483
      %v477 = vmul.f32 %v472, %v476
      %v478 = vadd.f32 %v477, 0.05243302
      %v479 = vmul.f32 %v472, %v478
      %v480 = vadd.f32 %v479, 0.18741608
      %v481 = vmul.f32 %v472, %v480
      %v482 = vadd.f32 %v481, 1.1283791
      %v483 = vmul.f32 %v385, %v482
      %v484 = vmul.f32 %v472, 3.8918573e-05
      %v485 = vadd.f32 %v484, 0.001143296
      %v486 = vmul.f32 %v472, %v485
      %v487 = vadd.f32 %v486, 0.014752088
      %v488 = vmul.f32 %v472, %v487
      %v489 = vadd.f32 %v488, 0.112945676
      %v490 = vmul.f32 %v472, %v489
      %v491 = vadd.f32 %v490, 0.4994258
      %v492 = vmul.f32 %v472, %v491
      %v493 = vadd.f32 %v492, 1.0
      %v494 = vrcp.pop %v493
      %v495 = vmul.f32 %v493, %v494
      %v496 = vsub.f32 1.0, %v495
      %v497 = vmul.f32 %v494, %v496
      %v498 = vadd.f32 %v494, %v497
      %vm499 = vweird.f32 %v493
      %vm500 = vweird.f32 %v494
      %vm501 = vmor %vm499, %vm500
      %v502 = vsel %vm501, %v494, %v498
      %v503 = vand.u32 2147483647, %v493
      %vm504 = vcmp.eq.f32.partialorder %v503, 8.507059e+37
      %v505 = vand.u32 %v493, 2147483648
      %v506 = vor.u32 1.1754944e-38, %v505
      %v507 = vsel %vm504, %v506, %v502
      %v508 = vmul.f32 %v483, %v507
      %v509 = vmin.f32 %v508, 1.0
      %v510 = vmax.f32 %v509, -1.0
      %v511 = vmul.f32 %v386, %v386
      %v512 = vmin.f32 16.0, %v511
      %v513 = vmul.f32 %v512, 2.1237322e-06
      %v514 = vadd.f32 %v513, 0.00028619796
      %v515 = vmul.f32 %v512, %v514
      %v516 = vadd.f32 %v515, 0.0036580483
      %v517 = vmul.f32 %v512, %v516
      %v518 = vadd.f32 %v517, 0.05243302
      %v519 = vmul.f32 %v512, %v518
      %v520 = vadd.f32 %v519, 0.18741608
      %v521 = vmul.f32 %v512, %v520
      %v522 = vadd.f32 %v521, 1.1283791
      %v523 = vmul.f32 %v386, %v522
      %v524 = vmul.f32 %v512, 3.8918573e-05
      %v525 = vadd.f32 %v524, 0.001143296
      %v526 = vmul.f32 %v512, %v525
      %v527 = vadd.f32 %v526, 0.014752088
      %v528 = vmul.f32 %v512, %v527
      %v529 = vadd.f32 %v528, 0.112945676
      %v530 = vmul.f32 %v512, %v529
      %v531 = vadd.f32 %v530, 0.4994258
      %v532 = vmul.f32 %v512, %v531
      %v533 = vadd.f32 %v532, 1.0
      %v534 = vrcp.pop %v533
      %v535 = vmul.f32 %v533, %v534
      %v536 = vsub.f32 1.0, %v535
      %v537 = vmul.f32 %v534, %v536
      %v538 = vadd.f32 %v534, %v537
      %vm539 = vweird.f32 %v533
      %vm540 = vweird.f32 %v534
      %vm541 = vmor %vm539, %vm540
      %v542 = vsel %vm541, %v534, %v538
      %v543 = vand.u32 2147483647, %v533
      %vm544 = vcmp.eq.f32.partialorder %v543, 8.507059e+37
      %v545 = vand.u32 %v533, 2147483648
      %v546 = vor.u32 1.1754944e-38, %v545
      %v547 = vsel %vm544, %v546, %v542
      %v548 = vmul.f32 %v523, %v547
      %v549 = vmin.f32 %v548, 1.0
      %v550 = vmax.f32 %v549, -1.0
      %v551 = vmul.f32 %v387, %v387
      %v552 = vmin.f32 16.0, %v551
      %v553 = vmul.f32 %v552, 2.1237322e-06
      %v554 = vadd.f32 %v553, 0.00028619796
      %v555 = vmul.f32 %v552, %v554
      %v556 = vadd.f32 %v555, 0.0036580483
      %v557 = vmul.f32 %v552, %v556
      %v558 = vadd.f32 %v557, 0.05243302
      %v559 = vmul.f32 %v552, %v558
      %v560 = vadd.f32 %v559, 0.18741608
      %v561 = vmul.f32 %v552, %v560
      %v562 = vadd.f32 %v561, 1.1283791
      %v563 = vmul.f32 %v387, %v562
      %v564 = vmul.f32 %v552, 3.8918573e-05
      %v565 = vadd.f32 %v564, 0.001143296
      %v566 = vmul.f32 %v552, %v565
      %v567 = vadd.f32 %v566, 0.014752088
      %v568 = vmul.f32 %v552, %v567
      %v569 = vadd.f32 %v568, 0.112945676
      %v570 = vmul.f32 %v552, %v569
      %v571 = vadd.f32 %v570, 0.4994258
      %v572 = vmul.f32 %v552, %v571
      %v573 = vadd.f32 %v572, 1.0
      %v574 = vrcp.pop %v573
      %v575 = vmul.f32 %v573, %v574
      %v576 = vsub.f32 1.0, %v575
      %v577 = vmul.f32 %v574, %v576
      %v578 = vadd.f32 %v574, %v577
      %vm579 = vweird.f32 %v573
      %vm580 = vweird.f32 %v574
      %vm581 = vmor %vm579, %vm580
      %v582 = vsel %vm581, %v574, %v578
      %v583 = vand.u32 2147483647, %v573
      %vm584 = vcmp.eq.f32.partialorder %v583, 8.507059e+37
      %v585 = vand.u32 %v573, 2147483648
      %v586 = vor.u32 1.1754944e-38, %v585
      %v587 = vsel %vm584, %v586, %v582
      %v588 = vmul.f32 %v563, %v587
      %v589 = vmin.f32 %v588, 1.0
      %v590 = vmax.f32 %v589, -1.0
      %v591 = vmul.f32 %v388, %v388
      %v592 = vmin.f32 16.0, %v591
      %v593 = vmul.f32 %v592, 2.1237322e-06
      %v594 = vadd.f32 %v593, 0.00028619796
      %v595 = vmul.f32 %v592, %v594
      %v596 = vadd.f32 %v595, 0.0036580483
      %v597 = vmul.f32 %v592, %v596
      %v598 = vadd.f32 %v597, 0.05243302
      %v599 = vmul.f32 %v592, %v598
      %v600 = vadd.f32 %v599, 0.18741608
      %v601 = vmul.f32 %v592, %v600
      %v602 = vadd.f32 %v601, 1.1283791
      %v603 = vmul.f32 %v388, %v602
      %v604 = vmul.f32 %v592, 3.8918573e-05
      %v605 = vadd.f32 %v604, 0.001143296
      %v606 = vmul.f32 %v592, %v605
      %v607 = vadd.f32 %v606, 0.014752088
      %v608 = vmul.f32 %v592, %v607
      %v609 = vadd.f32 %v608, 0.112945676
      %v610 = vmul.f32 %v592, %v609
      %v611 = vadd.f32 %v610, 0.4994258
      %v612 = vmul.f32 %v592, %v611
      %v613 = vadd.f32 %v612, 1.0
      %v614 = vrcp.pop %v613
      %v615 = vmul.f32 %v613, %v614
      %v616 = vsub.f32 1.0, %v615
      %v617 = vmul.f32 %v614, %v616
      %v618 = vadd.f32 %v614, %v617
      %vm619 = vweird.f32 %v613
      %vm620 = vweird.f32 %v614
      %vm621 = vmor %vm619, %vm620
      %v622 = vsel %vm621, %v614, %v618
      %v623 = vand.u32 2147483647, %v613
      %vm624 = vcmp.eq.f32.partialorder %v623, 8.507059e+37
      %v625 = vand.u32 %v613, 2147483648
      %v626 = vor.u32 1.1754944e-38, %v625
      %v627 = vsel %vm624, %v626, %v622
      %v628 = vmul.f32 %v603, %v627
      %v629 = vmin.f32 %v628, 1.0
      %v630 = vmax.f32 %v629, -1.0
      %v631 = vmul.f32 %v389, %v389
      %v632 = vmin.f32 16.0, %v631
      %v633 = vmul.f32 %v632, 2.1237322e-06
      %v634 = vadd.f32 %v633, 0.00028619796
      %v635 = vmul.f32 %v632, %v634
      %v636 = vadd.f32 %v635, 0.0036580483
      %v637 = vmul.f32 %v632, %v636
      %v638 = vadd.f32 %v637, 0.05243302
      %v639 = vmul.f32 %v632, %v638
      %v640 = vadd.f32 %v639, 0.18741608
      %v641 = vmul.f32 %v632, %v640
      %v642 = vadd.f32 %v641, 1.1283791
      %v643 = vmul.f32 %v389, %v642
      %v644 = vmul.f32 %v632, 3.8918573e-05
      %v645 = vadd.f32 %v644, 0.001143296
      %v646 = vmul.f32 %v632, %v645
      %v647 = vadd.f32 %v646, 0.014752088
      %v648 = vmul.f32 %v632, %v647
      %v649 = vadd.f32 %v648, 0.112945676
      %v650 = vmul.f32 %v632, %v649
      %v651 = vadd.f32 %v650, 0.4994258
      %v652 = vmul.f32 %v632, %v651
      %v653 = vadd.f32 %v652, 1.0
      %v654 = vrcp.pop %v653
      %v655 = vmul.f32 %v653, %v654
      %v656 = vsub.f32 1.0, %v655
      %v657 = vmul.f32 %v654, %v656
      %v658 = vadd.f32 %v654, %v657
      %vm659 = vweird.f32 %v653
      %vm660 = vweird.f32 %v654
      %vm661 = vmor %vm659, %vm660
      %v662 = vsel %vm661, %v654, %v658
      %v663 = vand.u32 2147483647, %v653
      %vm664 = vcmp.eq.f32.partialorder %v663, 8.507059e+37
      %v665 = vand.u32 %v653, 2147483648
      %v666 = vor.u32 1.1754944e-38, %v665
      %v667 = vsel %vm664, %v666, %v662
      %v668 = vmul.f32 %v643, %v667
      %v669 = vmin.f32 %v668, 1.0
      %v670 = vmax.f32 %v669, -1.0
      %v671 = vmul.f32 %v390, %v390
      %v672 = vmin.f32 16.0, %v671
      %v673 = vmul.f32 %v672, 2.1237322e-06
      %v674 = vadd.f32 %v673, 0.00028619796
      %v675 = vmul.f32 %v672, %v674
      %v676 = vadd.f32 %v675, 0.0036580483
      %v677 = vmul.f32 %v672, %v676
      %v678 = vadd.f32 %v677, 0.05243302
      %v679 = vmul.f32 %v672, %v678
      %v680 = vadd.f32 %v679, 0.18741608
      %v681 = vmul.f32 %v672, %v680
      %v682 = vadd.f32 %v681, 1.1283791
      %v683 = vmul.f32 %v390, %v682
      %v684 = vmul.f32 %v672, 3.8918573e-05
      %v685 = vadd.f32 %v684, 0.001143296
      %v686 = vmul.f32 %v672, %v685
      %v687 = vadd.f32 %v686, 0.014752088
      %v688 = vmul.f32 %v672, %v687
      %v689 = vadd.f32 %v688, 0.112945676
      %v690 = vmul.f32 %v672, %v689
      %v691 = vadd.f32 %v690, 0.4994258
      %v692 = vmul.f32 %v672, %v691
      %v693 = vadd.f32 %v692, 1.0
      %v694 = vrcp.pop %v693
      %v695 = vmul.f32 %v693, %v694
      %v696 = vsub.f32 1.0, %v695
      %v697 = vmul.f32 %v694, %v696
      %v698 = vadd.f32 %v694, %v697
      %vm699 = vweird.f32 %v693
      %vm700 = vweird.f32 %v694
      %vm701 = vmor %vm699, %vm700
      %v702 = vsel %vm701, %v694, %v698
      %v703 = vand.u32 2147483647, %v693
      %vm704 = vcmp.eq.f32.partialorder %v703, 8.507059e+37
      %v705 = vand.u32 %v693, 2147483648
      %v706 = vor.u32 1.1754944e-38, %v705
      %v707 = vsel %vm704, %v706, %v702
      %v708 = vmul.f32 %v683, %v707
      %v709 = vmin.f32 %v708, 1.0
      %v710 = vmax.f32 %v709, -1.0
      %v711 = vadd.f32 %v430, 1.0
      %v712 = vadd.f32 %v470, 1.0
      %v713 = vadd.f32 %v510, 1.0
      %v714 = vadd.f32 %v550, 1.0
      %v715 = vadd.f32 %v590, 1.0
      %v716 = vadd.f32 %v630, 1.0
      %v717 = vadd.f32 %v670, 1.0
      %v718 = vadd.f32 %v710, 1.0
      %v719 = vmul.f32 %v375, %v711
      %v720 = vmul.f32 %v376, %v712
      %v721 = vmul.f32 %v377, %v713
      %v722 = vmul.f32 %v378, %v714
      %v723 = vmul.f32 %v379, %v715
      %v724 = vmul.f32 %v380, %v716
      %v725 = vmul.f32 %v381, %v717
      %v726 = vmul.f32 %v382, %v718
      %728 = vset.pattern.permute.xlu0 0
      %729 = vperm.xlu0 %728, %v273
      %v730 = vpop.permute.xlu0 %729
      %vm732 = vcmask 261120
      %v734 = vsel %vm732, %v268, 0
      %736 = vmatpush.msra.mxu0 0.0
      %737 = vmatpush.msra.mxu0 0.0
      %738 = vmatpush.msra.mxu0 0.0
      %739 = vmatpush.msra.mxu0 0.0
      %740 = vmatpush.msra.mxu0 0.0
      %741 = vmatpush.msra.mxu0 0.0
      %742 = vmatpush.msra.mxu0 0.0
      %743 = vmatpush.msra.mxu0 0.0
      %744 = vmatpush.msra.mxu0 0.0
      %745 = vmatpush.msra.mxu0 0.0
      %746 = vmatpush.msra.mxu0 0.0
      %747 = vmatpush.msra.mxu0 0.0
      %748 = vmatpush.msra.mxu0 %v725
      %749 = vmatpush.msra.mxu0 %v723
      %750 = vmatpush.msra.mxu0 %v721
      %751 = vmatpush.msra.mxu0 %v719
      %752 = vmatmul.f32.gmra.mxu0 %v734
      %v753 = vpop.f32.mrf.mxu0
      %v754 = vadd.f32 %v730, %v753
      %755 = vdwg.mxu0
      %756 = vmatpush.msra.mxu0 0.0
      %757 = vmatpush.msra.mxu0 0.0
      %758 = vmatpush.msra.mxu0 0.0
      %759 = vmatpush.msra.mxu0 0.0
      %760 = vmatpush.msra.mxu0 0.0
      %761 = vmatpush.msra.mxu0 0.0
      %762 = vmatpush.msra.mxu0 0.0
      %763 = vmatpush.msra.mxu0 0.0
      %764 = vmatpush.msra.mxu0 0.0
      %765 = vmatpush.msra.mxu0 0.0
      %766 = vmatpush.msra.mxu0 0.0
      %767 = vmatpush.msra.mxu0 0.0
      %768 = vmatpush.msra.mxu0 %v726
      %769 = vmatpush.msra.mxu0 %v724
      %770 = vmatpush.msra.mxu0 %v722
      %771 = vmatpush.msra.mxu0 %v720
      %772 = vmatmul.f32.gmra.mxu0 %v734
      %v773 = vpop.f32.mrf.mxu0
      %v774 = vadd.f32 %v730, %v773
      %775 = vdwg.mxu0
      %v778 = vrot.slane %v774, 4
      %v779 = vsel %vm312, %v754, %v778
      %781 = vst [vmem:[%s262] sm:$0xff] %v779
      %s782 = smul.u32 2, %s21
      %p783 = scmp.lt.s32.totalorder %s20, 1
      %s784 = scalar_select %p783, %s20, 1
      %p785 = scmp.lt.s32.totalorder %s782, 1
      %s786 = scalar_select %p785, %s782, 1
      %s787 = smul.addr %s784, 2
      %s788 = sadd.s32 %s786, %s787
      %s789 = smul.addr %s788, 4
      %s790 = scalar_lea.vmem %s5, %s789
      // Predicated region
      $region41: #{channel_fc.1} parent=39 // pred_check
        %p791 = pneg %p160
      $region42: #{channel_fc.1} parent=39 // pred_check_branch
        %793 = sbr.rel (%p791) target = $region44
      $region43: #{channel_fc.1} parent=39 // pred_region
        %s794 = smul.u32 2, %s21
      $region44: #{channel_fc.1} parent=39 // pred_fallthru
        _
    $region40: #{channel_fc.1} parent=5 // pred_fallthru
      _
    %p795 = scmp.le.s32.totalorder 2, %s11
    // Predicated region
    $region45: #{channel_fc.1} parent=5 // pred_check
      %p796 = pneg %p795
    $region46: #{channel_fc.1} parent=5 // pred_check_branch
      %798 = sbr.rel (%p796) target = $region48
    $region47: #{channel_fc.1} parent=5 // pred_region
      %s799 = ssub.s32 %s11, 2
      // Predicated region
      $region49: #{channel_fc.1} parent=47 // pred_check
        %p800 = pneg %p166
      $region50: #{channel_fc.1} parent=47 // pred_check_branch
        %802 = sbr.rel (%p800) target = $region52
      $region51: #{channel_fc.1} parent=47 // pred_region
        %s803 = smul.u32 2, %s23
        %p804 = scmp.lt.s32.totalorder %s22, 1
        %s805 = scalar_select %p804, %s22, 1
        %p806 = scmp.lt.s32.totalorder %s803, 1
        %s807 = scalar_select %p806, %s803, 1
        %s808 = smul.addr %s805, 2
        %s809 = sadd.s32 %s807, %s808
        %s810 = smul.addr %s809, 4
        %s811 = scalar_lea.vmem %s5, %s810
      $region52: #{channel_fc.1} parent=47 // pred_fallthru
        _
    $region48: #{channel_fc.1} parent=5 // pred_fallthru
      _
  $region6: #{channel_fc.1} parent=0 // loop_footer
    %s15 = sadd.s32 1, %s11
  $region7: #{channel_fc.1} parent=0 // loop_footer_branch
    %10 = sbr.rel target = $region3
  $region8: #{channel_fc.1} parent=0 // loop_exit
    _

</llo_original>
